<compile_context>
chip_gen: v7x
topology: tpu7x:2x2x1
jax: 0.10.0
libtpu: 0.0.40
codegen_flags: <defaults>
</compile_context>

<pallas_src>
import functools

import jax
import jax.numpy as jnp
from jax import lax
from jax.experimental import pallas as pl
from jax.experimental.pallas import tpu as pltpu

EPS = 1e-5


def _vmem_limit_bytes():
    """Generation-aware scoped-VMEM limit (v7x has only 64 MiB physical)."""
    try:
        cap = pltpu.get_tpu_info().vmem_capacity_bytes
    except Exception:
        cap = 64 * 1024 * 1024
    return int(min(cap // 2, 64 * 1024 * 1024))


def _pick_spatial_tile(P, max_tp=2048):
    """Largest lane-dense (multiple-of-128) tile of the flattened spatial axis."""
    if P <= max_tp:
        return P
    for tp in range(max_tp, 127, -128):
        if P % tp == 0:
            return tp
    return P


def _make_conv_stats_kernel(Cin, Cout, H, W, KH, KW, pad, KPAD):
    """Pass 1: fused conv (MXU im2col) + per-image per-channel sum / sumsq."""
    P = H * W
    KKC = KH * KW * Cin
    halo = pad * (W + 1)                          # max |flattened tap offset|
    lhalo = ((halo + 127) // 128) * 128           # left halo rounded -> aligned interior
    PH = lhalo + P + halo
    taps = [(kh, kw) for kh in range(KH) for kw in range(KW)]

    def kernel(x_ref, p_ref, y_ref, st_ref, xh_ref, slab_ref):
        # x_ref : (1, Cin, P)     p_ref : (Cout, KPAD+1)  [tap-major weights | 0-pad | bias]
        # y_ref : (1, Cout, P)    st_ref: (1, Cout, 2)    [sum | sumsq]
        # xh_ref: (Cin, PH)       slab_ref: (KPAD, P)   VMEM scratch

        # Zero ONLY the halo strips; interior is fully overwritten below. Re-done every
        # grid step because the batch axis is 'parallel' (megacore-safe, no step-0 gate).
        if pad > 0:
            xh_ref[:, 0:lhalo] = jnp.zeros((Cin, lhalo), jnp.float32)
            xh_ref[:, lhalo + P:PH] = jnp.zeros((Cin, halo), jnp.float32)
        xh_ref[:, lhalo:lhalo + P] = x_ref[0]

        if pad > 0:
            # per-lane column index: horizontal-wrap mask for dw != 0 taps; vertical
            # out-of-range taps land entirely in the zero halo, so no mask needed.
            wo = lax.broadcasted_iota(jnp.int32, (1, P), 1) % W

        # im2col: stack the KH*KW shifted (Cin, P) windows tap-major into the slab.
        for t, (kh, kw) in enumerate(taps):
            dh, dw = kh - pad, kw - pad
            start = lhalo + dh * W + dw
            win = xh_ref[:, start:start + P]                      # static lane shift
            if dw != 0:
                valid = (wo + dw >= 0) & (wo + dw <= W - 1)
                win = jnp.where(valid, win, 0.0)
            slab_ref[t * Cin:(t + 1) * Cin, :] = win
        if KPAD > KKC:
            # keep the sublane-padding rows zero so the matching zero weight columns
            # never multiply stale scratch contents.
            slab_ref[KKC:KPAD, :] = jnp.zeros((KPAD - KKC, P), jnp.float32)

        w = p_ref[:, 0:KPAD]                                       # (Cout, KPAD)
        bias = p_ref[:, KPAD:KPAD + 1]                             # (Cout, 1)
        # Single MXU matmul for all 8 output channels (f32 accumulation).
        y = jnp.dot(w, slab_ref[...], preferred_element_type=jnp.float32) + bias

        y_ref[0] = y                                               # one unmasked store
        s = jnp.sum(y, axis=1, keepdims=True)                      # (Cout, 1)
        ss = jnp.sum(y * y, axis=1, keepdims=True)                 # (Cout, 1)
        st_ref[0] = jnp.concatenate([s, ss], axis=1)               # (Cout, 2)

    return kernel, PH


def _make_bn_act_kernel(Cout, n_softmax):
    """Pass 2: folded-BN FMA + channel softmax, single full-tile store."""

    def kernel(y_ref, p_ref, o_ref):
        # y_ref: (1, Cout, TP)   p_ref: (Cout, 2) [scale | shift]   o_ref: (1, Cout, TP)
        scale = p_ref[:, 0:1]
        shift = p_ref[:, 1:2]
        z = y_ref[0] * scale + shift                               # one FMA pass
        if n_softmax == 2:
            # 2-way softmax == sigmoid of the logit difference: no cross-sublane
            # max/sum reductions, no reciprocal broadcast; exp goes to the EUP slot.
            d = z[1:2, :] - z[0:1, :]
            p0 = 1.0 / (1.0 + jnp.exp(d))                          # softmax row 0
            sm = jnp.concatenate([p0, 1.0 - p0], axis=0)
        else:
            s = z[0:n_softmax, :]
            s = jnp.exp(s - jnp.max(s, axis=0, keepdims=True))
            sm = s * pl.reciprocal(jnp.sum(s, axis=0, keepdims=True), approx=False)
        # assemble the full (Cout, TP) tile in registers -> one unmasked store
        o_ref[0] = jnp.concatenate([sm, z[n_softmax:, :]], axis=0)

    return kernel


def detection_block_forward(x_nchw, w_oihw, b, gamma, beta, *, padding=1, n_softmax=2):
    """x_nchw: (N, Cin, H, W); w_oihw: (Cout, Cin, KH, KW); b/gamma/beta: (Cout,)."""
    N, Cin, H, W = x_nchw.shape
    Cout, Cin2, KH, KW = w_oihw.shape
    assert Cin2 == Cin
    # lane-dense formulation assumes a 'same' conv (DetectionBlock: k=3, pad=1)
    assert H + 2 * padding - KH + 1 == H and W + 2 * padding - KW + 1 == W
    P = H * W
    KKC = KH * KW * Cin
    KPAD = ((KKC + 7) // 8) * 8
    vmem_limit = _vmem_limit_bytes()

    x_flat = x_nchw.reshape(N, Cin, P).astype(jnp.float32)

    # Tap-major (kh, kw, ci) weight layout matching the im2col slab rows, padded to a
    # sublane multiple, with the bias appended as one extra column -> single param DMA.
    w_t = jnp.transpose(w_oihw.astype(jnp.float32), (0, 2, 3, 1)).reshape(Cout, KKC)
    params1 = jnp.zeros((Cout, KPAD + 1), jnp.float32)
    params1 = params1.at[:, :KKC].set(w_t).at[:, KPAD].set(b.astype(jnp.float32))

    conv_kernel, PH = _make_conv_stats_kernel(Cin, Cout, H, W, KH, KW, padding, KPAD)
    y, stats = pl.pallas_call(
        conv_kernel,
        grid=(N,),
        out_shape=(jax.ShapeDtypeStruct((N, Cout, P), jnp.float32),
                   jax.ShapeDtypeStruct((N, Cout, 2), jnp.float32)),
        in_specs=[pl.BlockSpec((1, Cin, P), lambda n: (n, 0, 0)),
                  pl.BlockSpec((Cout, KPAD + 1), lambda n: (0, 0))],    # resident params
        out_specs=(pl.BlockSpec((1, Cout, P), lambda n: (n, 0, 0)),
                   pl.BlockSpec((1, Cout, 2), lambda n: (n, 0, 0))),
        scratch_shapes=[pltpu.VMEM((Cin, PH), jnp.float32),
                        pltpu.VMEM((KPAD, P), jnp.float32)],
        compiler_params=pltpu.CompilerParams(
            dimension_semantics=("parallel",),
            vmem_limit_bytes=vmem_limit),
    )(x_flat, params1)

    # Fold training-mode BatchNorm into a per-channel scale/shift. This is a tiny
    # (N, Cout, 2) reduction -- negligible next to the gridded passes. Biased variance,
    # guarded against cancellation in the E[y^2]-mean^2 form.
    cnt = float(N * P)
    mean = jnp.sum(stats[:, :, 0], axis=0) / cnt
    var = jnp.maximum(jnp.sum(stats[:, :, 1], axis=0) / cnt - mean * mean, 0.0)
    scale = gamma.astype(jnp.float32) * lax.rsqrt(var + EPS)
    shift = beta.astype(jnp.float32) - mean * scale
    params2 = jnp.stack([scale, shift], axis=1)                    # (Cout, 2)

    TP = _pick_spatial_tile(P)
    bn_kernel = _make_bn_act_kernel(Cout, n_softmax)
    out = pl.pallas_call(
        bn_kernel,
        grid=(N, P // TP),
        out_shape=jax.ShapeDtypeStruct((N, Cout, P), jnp.float32),
        in_specs=[pl.BlockSpec((1, Cout, TP), lambda n, t: (n, 0, t)),
                  pl.BlockSpec((Cout, 2), lambda n, t: (0, 0))],
        out_specs=pl.BlockSpec((1, Cout, TP), lambda n, t: (n, 0, t)),
        compiler_params=pltpu.CompilerParams(
            dimension_semantics=("parallel", "parallel"),
            vmem_limit_bytes=vmem_limit),
        input_output_aliases={0: 0},            # reuse y's HBM buffer for the output
    )(y, params2)

    # TODO(synk): BatchNorm running_mean/running_var buffer updates (module state
    # mutation) are not modeled; only the training-mode forward output is reproduced.
    # TODO(synk): at detection resolutions, additionally tile the conv pass over rows
    # with a manual halo DMA (memory_space=pl.ANY + pltpu.make_async_copy) so the
    # per-step im2col slab stays within VMEM; the BN/softmax pass is already tiled.
    return out.reshape(N, Cout, H, W)            # (N, Cout, H*W) -> NCHW: free reshape


def reference_forward(x_nchw, w_oihw, b, gamma, beta, *, padding=1, n_softmax=2):
    """Pure-JAX reference mirroring the PyTorch training-mode forward."""
    y = lax.conv_general_dilated(
        x_nchw.astype(jnp.float32), w_oihw.astype(jnp.float32),
        window_strides=(1, 1), padding=[(padding, padding)] * 2,
        dimension_numbers=("NCHW", "OIHW", "NCHW"))
    y = y + b.reshape(1, -1, 1, 1)
    mean = jnp.mean(y, axis=(0, 2, 3), keepdims=True)
    var = jnp.mean((y - mean) ** 2, axis=(0, 2, 3), keepdims=True)
    y = (y - mean) * lax.rsqrt(var + EPS)
    y = y * gamma.reshape(1, -1, 1, 1) + beta.reshape(1, -1, 1, 1)
    sm = jax.nn.softmax(y[:, :n_softmax], axis=1)          # nn.Softmax() -> dim=1 on 4-D
    return jnp.concatenate([sm, y[:, n_softmax:]], axis=1)


if __name__ == "__main__":
    # Small shapes consistent with the module: in_channels=4, kernel_size=3.
    N, Cin, H, W = 2, 4, 16, 16
    K = 3
    C1, C2 = 2, 6            # conv1 / conv2 output channels
    Cout = C1 + C2           # 8 total after concat

    key = jax.random.PRNGKey(0)
    k1, k2, k3, k4, k5 = jax.random.split(key, 5)

    x = jax.random.normal(k1, (N, Cin, H, W), jnp.float32)
    w1 = 0.1 * jax.random.normal(k2, (C1, Cin, K, K), jnp.float32)
    w2 = 0.1 * jax.random.normal(k3, (C2, Cin, K, K), jnp.float32)
    b1 = 0.1 * jax.random.normal(k4, (C1,), jnp.float32)
    b2 = 0.1 * jax.random.normal(k5, (C2,), jnp.float32)
    w = jnp.concatenate([w1, w2], axis=0)        # (8, Cin, K, K)
    b = jnp.concatenate([b1, b2], axis=0)        # (8,)
    gamma = jnp.ones((Cout,), jnp.float32)       # BN affine defaults
    beta = jnp.zeros((Cout,), jnp.float32)

    fwd = jax.jit(functools.partial(detection_block_forward, padding=1, n_softmax=C1))
    out = jax.block_until_ready(fwd(x, w, b, gamma, beta))

    ref = reference_forward(x, w, b, gamma, beta, padding=1, n_softmax=C1)
    assert out.shape == (N, Cout, H, W), out.shape
    # 2e-2 tolerance: the conv now runs on the MXU, whose bf16-pass rounding of the f32
    # operands may differ from the XLA reference conv's passes (worst-case ~1e-2 here);
    # any logic error (wrong tap/mask/BN stat) produces errors orders of magnitude larger.
    assert jnp.allclose(out, ref, atol=2e-2, rtol=2e-2), float(
        jnp.max(jnp.abs(out - ref)))

    print("KERNEL_OK")
</pallas_src>

<mosaic_0001>
module attributes {stable_mosaic.version = 11 : i64} {
  func.func @kernel(%arg0: i32, %arg1: memref<1x4x256xf32, #tpu.memory_space<vmem>>, %arg2: memref<8x41xf32, #tpu.memory_space<vmem>>, %arg3: memref<1x8x256xf32, #tpu.memory_space<vmem>>, %arg4: memref<1x8x2xf32, #tpu.memory_space<vmem>>, %arg5: memref<4x401xf32, #tpu.memory_space<vmem>>, %arg6: memref<40x256xf32, #tpu.memory_space<vmem>>) attributes {dimension_semantics = [#tpu.dimension_semantics<parallel>], iteration_bounds = array<i64: 2>, scalar_prefetch = 0 : i64, scratch_operands = 2 : i64, tpu.core_type = #tpu.core_type<tc>, window_params = [{transform_indices = @transform_0, window_bounds = array<i64: 1, 4, 256>}, {pipeline_mode = #tpu.pipeline_mode<synchronous>, transform_indices = @transform_1, window_bounds = array<i64: 8, 41>}, {transform_indices = @transform_2, window_bounds = array<i64: 1, 8, 256>}, {transform_indices = @transform_3, window_bounds = array<i64: 1, 8, 2>}]} {
    %cst = arith.constant 0.000000e+00 : f32
    %0 = vector.broadcast %cst : f32 to vector<4x128xf32>
    %c0 = arith.constant 0 : index
    %c0_0 = arith.constant 0 : index
    %1 = vector.load %arg5[%c0, %c0_0] : memref<4x401xf32, #tpu.memory_space<vmem>>, vector<4x128xf32>
    tpu.vector_store %arg5[%c0, %c0_0], %0 {strides = array<i32>} : memref<4x401xf32, #tpu.memory_space<vmem>>, vector<4x128xf32>,
    %cst_1 = arith.constant 0.000000e+00 : f32
    %2 = vector.broadcast %cst_1 : f32 to vector<4x17xf32>
    %c0_2 = arith.constant 0 : index
    %c384 = arith.constant 384 : index
    %3 = vector.load %arg5[%c0_2, %c384] : memref<4x401xf32, #tpu.memory_space<vmem>>, vector<4x17xf32>
    tpu.vector_store %arg5[%c0_2, %c384], %2 {strides = array<i32>} : memref<4x401xf32, #tpu.memory_space<vmem>>, vector<4x17xf32>,
    %c0_3 = arith.constant 0 : index
    %c0_4 = arith.constant 0 : index
    %c0_5 = arith.constant 0 : index
    %4 = vector.load %arg1[%c0_3, %c0_4, %c0_5] : memref<1x4x256xf32, #tpu.memory_space<vmem>>, vector<1x4x256xf32>
    %5 = vector.shape_cast %4 : vector<1x4x256xf32> to vector<4x256xf32>
    %c0_6 = arith.constant 0 : index
    %c128 = arith.constant 128 : index
    %6 = vector.load %arg5[%c0_6, %c128] : memref<4x401xf32, #tpu.memory_space<vmem>>, vector<4x256xf32>
    tpu.vector_store %arg5[%c0_6, %c128], %5 {strides = array<i32>} : memref<4x401xf32, #tpu.memory_space<vmem>>, vector<4x256xf32>,
    %7 = tpu.iota {dimensions = array<i32: 1>} : vector<1x256xi32>
    %c16_i32 = arith.constant 16 : i32
    %c0_i32 = arith.constant 0 : i32
    %8 = arith.cmpi eq, %c16_i32, %c0_i32 : i32
    %c1_i32 = arith.constant 1 : i32
    %9 = arith.select %8, %c1_i32, %c16_i32 : i32
    %10 = vector.broadcast %9 : i32 to vector<1x256xi32>
    %11 = arith.remsi %7, %10 : vector<1x256xi32>
    %c0_i32_7 = arith.constant 0 : i32
    %12 = vector.broadcast %c0_i32_7 : i32 to vector<1x256xi32>
    %13 = arith.cmpi ne, %11, %12 : vector<1x256xi32>
    %c0_i32_8 = arith.constant 0 : i32
    %14 = vector.broadcast %c0_i32_8 : i32 to vector<1x256xi32>
    %15 = arith.cmpi slt, %11, %14 : vector<1x256xi32>
    %c0_i32_9 = arith.constant 0 : i32
    %16 = arith.cmpi slt, %9, %c0_i32_9 : i32
    %17 = vector.broadcast %16 : i1 to vector<1x256xi1>
    %18 = vector.broadcast %17 : vector<1x256xi1> to vector<1x256xi1>
    %19 = arith.xori %15, %18 : vector<1x256xi1>
    %20 = arith.andi %19, %13 : vector<1x256xi1>
    %21 = vector.broadcast %9 : i32 to vector<1x256xi32>
    %22 = arith.addi %11, %21 : vector<1x256xi32>
    %23 = arith.select %20, %22, %11 : vector<1x256xi1>, vector<1x256xi32>
    %c0_10 = arith.constant 0 : index
    %c111 = arith.constant 111 : index
    %24 = vector.load %arg5[%c0_10, %c111] : memref<4x401xf32, #tpu.memory_space<vmem>>, vector<4x256xf32>
    %c-1_i32 = arith.constant -1 : i32
    %25 = vector.broadcast %c-1_i32 : i32 to vector<1x256xi32>
    %26 = arith.addi %23, %25 : vector<1x256xi32>
    %c0_i32_11 = arith.constant 0 : i32
    %27 = vector.broadcast %c0_i32_11 : i32 to vector<1x256xi32>
    %28 = arith.cmpi sge, %26, %27 : vector<1x256xi32>
    %c-1_i32_12 = arith.constant -1 : i32
    %29 = vector.broadcast %c-1_i32_12 : i32 to vector<1x256xi32>
    %30 = arith.addi %23, %29 : vector<1x256xi32>
    %c15_i32 = arith.constant 15 : i32
    %31 = vector.broadcast %c15_i32 : i32 to vector<1x256xi32>
    %32 = arith.cmpi sle, %30, %31 : vector<1x256xi32>
    %33 = arith.andi %28, %32 : vector<1x256xi1>
    %cst_13 = arith.constant 0.000000e+00 : f32
    %34 = vector.shape_cast %33 : vector<1x256xi1> to vector<1x256xi1>
    %35 = vector.broadcast %34 : vector<1x256xi1> to vector<4x256xi1>
    %36 = vector.broadcast %cst_13 : f32 to vector<4x256xf32>
    %37 = arith.select %35, %24, %36 : vector<4x256xi1>, vector<4x256xf32>
    %c0_14 = arith.constant 0 : index
    %c0_15 = arith.constant 0 : index
    %38 = vector.load %arg6[%c0_14, %c0_15] : memref<40x256xf32, #tpu.memory_space<vmem>>, vector<4x256xf32>
    tpu.vector_store %arg6[%c0_14, %c0_15], %37 {strides = array<i32>} : memref<40x256xf32, #tpu.memory_space<vmem>>, vector<4x256xf32>,
    %c0_16 = arith.constant 0 : index
    %c112 = arith.constant 112 : index
    %39 = vector.load %arg5[%c0_16, %c112] : memref<4x401xf32, #tpu.memory_space<vmem>>, vector<4x256xf32>
    %c4 = arith.constant 4 : index
    %c0_17 = arith.constant 0 : index
    %40 = vector.load %arg6[%c4, %c0_17] : memref<40x256xf32, #tpu.memory_space<vmem>>, vector<4x256xf32>
    tpu.vector_store %arg6[%c4, %c0_17], %39 {strides = array<i32>} : memref<40x256xf32, #tpu.memory_space<vmem>>, vector<4x256xf32>,
    %c0_18 = arith.constant 0 : index
    %c113 = arith.constant 113 : index
    %41 = vector.load %arg5[%c0_18, %c113] : memref<4x401xf32, #tpu.memory_space<vmem>>, vector<4x256xf32>
    %c1_i32_19 = arith.constant 1 : i32
    %42 = vector.broadcast %c1_i32_19 : i32 to vector<1x256xi32>
    %43 = arith.addi %23, %42 : vector<1x256xi32>
    %c0_i32_20 = arith.constant 0 : i32
    %44 = vector.broadcast %c0_i32_20 : i32 to vector<1x256xi32>
    %45 = arith.cmpi sge, %43, %44 : vector<1x256xi32>
    %c1_i32_21 = arith.constant 1 : i32
    %46 = vector.broadcast %c1_i32_21 : i32 to vector<1x256xi32>
    %47 = arith.addi %23, %46 : vector<1x256xi32>
    %c15_i32_22 = arith.constant 15 : i32
    %48 = vector.broadcast %c15_i32_22 : i32 to vector<1x256xi32>
    %49 = arith.cmpi sle, %47, %48 : vector<1x256xi32>
    %50 = arith.andi %45, %49 : vector<1x256xi1>
    %cst_23 = arith.constant 0.000000e+00 : f32
    %51 = vector.shape_cast %50 : vector<1x256xi1> to vector<1x256xi1>
    %52 = vector.broadcast %51 : vector<1x256xi1> to vector<4x256xi1>
    %53 = vector.broadcast %cst_23 : f32 to vector<4x256xf32>
    %54 = arith.select %52, %41, %53 : vector<4x256xi1>, vector<4x256xf32>
    %c8 = arith.constant 8 : index
    %c0_24 = arith.constant 0 : index
    %55 = vector.load %arg6[%c8, %c0_24] : memref<40x256xf32, #tpu.memory_space<vmem>>, vector<4x256xf32>
    tpu.vector_store %arg6[%c8, %c0_24], %54 {strides = array<i32>} : memref<40x256xf32, #tpu.memory_space<vmem>>, vector<4x256xf32>,
    %c0_25 = arith.constant 0 : index
    %c127 = arith.constant 127 : index
    %56 = vector.load %arg5[%c0_25, %c127] : memref<4x401xf32, #tpu.memory_space<vmem>>, vector<4x256xf32>
    %c-1_i32_26 = arith.constant -1 : i32
    %57 = vector.broadcast %c-1_i32_26 : i32 to vector<1x256xi32>
    %58 = arith.addi %23, %57 : vector<1x256xi32>
    %c0_i32_27 = arith.constant 0 : i32
    %59 = vector.broadcast %c0_i32_27 : i32 to vector<1x256xi32>
    %60 = arith.cmpi sge, %58, %59 : vector<1x256xi32>
    %c-1_i32_28 = arith.constant -1 : i32
    %61 = vector.broadcast %c-1_i32_28 : i32 to vector<1x256xi32>
    %62 = arith.addi %23, %61 : vector<1x256xi32>
    %c15_i32_29 = arith.constant 15 : i32
    %63 = vector.broadcast %c15_i32_29 : i32 to vector<1x256xi32>
    %64 = arith.cmpi sle, %62, %63 : vector<1x256xi32>
    %65 = arith.andi %60, %64 : vector<1x256xi1>
    %cst_30 = arith.constant 0.000000e+00 : f32
    %66 = vector.shape_cast %65 : vector<1x256xi1> to vector<1x256xi1>
    %67 = vector.broadcast %66 : vector<1x256xi1> to vector<4x256xi1>
    %68 = vector.broadcast %cst_30 : f32 to vector<4x256xf32>
    %69 = arith.select %67, %56, %68 : vector<4x256xi1>, vector<4x256xf32>
    %c12 = arith.constant 12 : index
    %c0_31 = arith.constant 0 : index
    %70 = vector.load %arg6[%c12, %c0_31] : memref<40x256xf32, #tpu.memory_space<vmem>>, vector<4x256xf32>
    tpu.vector_store %arg6[%c12, %c0_31], %69 {strides = array<i32>} : memref<40x256xf32, #tpu.memory_space<vmem>>, vector<4x256xf32>,
    %c0_32 = arith.constant 0 : index
    %c128_33 = arith.constant 128 : index
    %71 = vector.load %arg5[%c0_32, %c128_33] : memref<4x401xf32, #tpu.memory_space<vmem>>, vector<4x256xf32>
    %c16 = arith.constant 16 : index
    %c0_34 = arith.constant 0 : index
    %72 = vector.load %arg6[%c16, %c0_34] : memref<40x256xf32, #tpu.memory_space<vmem>>, vector<4x256xf32>
    tpu.vector_store %arg6[%c16, %c0_34], %71 {strides = array<i32>} : memref<40x256xf32, #tpu.memory_space<vmem>>, vector<4x256xf32>,
    %c0_35 = arith.constant 0 : index
    %c129 = arith.constant 129 : index
    %73 = vector.load %arg5[%c0_35, %c129] : memref<4x401xf32, #tpu.memory_space<vmem>>, vector<4x256xf32>
    %c1_i32_36 = arith.constant 1 : i32
    %74 = vector.broadcast %c1_i32_36 : i32 to vector<1x256xi32>
    %75 = arith.addi %23, %74 : vector<1x256xi32>
    %c0_i32_37 = arith.constant 0 : i32
    %76 = vector.broadcast %c0_i32_37 : i32 to vector<1x256xi32>
    %77 = arith.cmpi sge, %75, %76 : vector<1x256xi32>
    %c1_i32_38 = arith.constant 1 : i32
    %78 = vector.broadcast %c1_i32_38 : i32 to vector<1x256xi32>
    %79 = arith.addi %23, %78 : vector<1x256xi32>
    %c15_i32_39 = arith.constant 15 : i32
    %80 = vector.broadcast %c15_i32_39 : i32 to vector<1x256xi32>
    %81 = arith.cmpi sle, %79, %80 : vector<1x256xi32>
    %82 = arith.andi %77, %81 : vector<1x256xi1>
    %cst_40 = arith.constant 0.000000e+00 : f32
    %83 = vector.shape_cast %82 : vector<1x256xi1> to vector<1x256xi1>
    %84 = vector.broadcast %83 : vector<1x256xi1> to vector<4x256xi1>
    %85 = vector.broadcast %cst_40 : f32 to vector<4x256xf32>
    %86 = arith.select %84, %73, %85 : vector<4x256xi1>, vector<4x256xf32>
    %c20 = arith.constant 20 : index
    %c0_41 = arith.constant 0 : index
    %87 = vector.load %arg6[%c20, %c0_41] : memref<40x256xf32, #tpu.memory_space<vmem>>, vector<4x256xf32>
    tpu.vector_store %arg6[%c20, %c0_41], %86 {strides = array<i32>} : memref<40x256xf32, #tpu.memory_space<vmem>>, vector<4x256xf32>,
    %c0_42 = arith.constant 0 : index
    %c143 = arith.constant 143 : index
    %88 = vector.load %arg5[%c0_42, %c143] : memref<4x401xf32, #tpu.memory_space<vmem>>, vector<4x256xf32>
    %c-1_i32_43 = arith.constant -1 : i32
    %89 = vector.broadcast %c-1_i32_43 : i32 to vector<1x256xi32>
    %90 = arith.addi %23, %89 : vector<1x256xi32>
    %c0_i32_44 = arith.constant 0 : i32
    %91 = vector.broadcast %c0_i32_44 : i32 to vector<1x256xi32>
    %92 = arith.cmpi sge, %90, %91 : vector<1x256xi32>
    %c-1_i32_45 = arith.constant -1 : i32
    %93 = vector.broadcast %c-1_i32_45 : i32 to vector<1x256xi32>
    %94 = arith.addi %23, %93 : vector<1x256xi32>
    %c15_i32_46 = arith.constant 15 : i32
    %95 = vector.broadcast %c15_i32_46 : i32 to vector<1x256xi32>
    %96 = arith.cmpi sle, %94, %95 : vector<1x256xi32>
    %97 = arith.andi %92, %96 : vector<1x256xi1>
    %cst_47 = arith.constant 0.000000e+00 : f32
    %98 = vector.shape_cast %97 : vector<1x256xi1> to vector<1x256xi1>
    %99 = vector.broadcast %98 : vector<1x256xi1> to vector<4x256xi1>
    %100 = vector.broadcast %cst_47 : f32 to vector<4x256xf32>
    %101 = arith.select %99, %88, %100 : vector<4x256xi1>, vector<4x256xf32>
    %c24 = arith.constant 24 : index
    %c0_48 = arith.constant 0 : index
    %102 = vector.load %arg6[%c24, %c0_48] : memref<40x256xf32, #tpu.memory_space<vmem>>, vector<4x256xf32>
    tpu.vector_store %arg6[%c24, %c0_48], %101 {strides = array<i32>} : memref<40x256xf32, #tpu.memory_space<vmem>>, vector<4x256xf32>,
    %c0_49 = arith.constant 0 : index
    %c144 = arith.constant 144 : index
    %103 = vector.load %arg5[%c0_49, %c144] : memref<4x401xf32, #tpu.memory_space<vmem>>, vector<4x256xf32>
    %c28 = arith.constant 28 : index
    %c0_50 = arith.constant 0 : index
    %104 = vector.load %arg6[%c28, %c0_50] : memref<40x256xf32, #tpu.memory_space<vmem>>, vector<4x256xf32>
    tpu.vector_store %arg6[%c28, %c0_50], %103 {strides = array<i32>} : memref<40x256xf32, #tpu.memory_space<vmem>>, vector<4x256xf32>,
    %c0_51 = arith.constant 0 : index
    %c145 = arith.constant 145 : index
    %105 = vector.load %arg5[%c0_51, %c145] : memref<4x401xf32, #tpu.memory_space<vmem>>, vector<4x256xf32>
    %c1_i32_52 = arith.constant 1 : i32
    %106 = vector.broadcast %c1_i32_52 : i32 to vector<1x256xi32>
    %107 = arith.addi %23, %106 : vector<1x256xi32>
    %c0_i32_53 = arith.constant 0 : i32
    %108 = vector.broadcast %c0_i32_53 : i32 to vector<1x256xi32>
    %109 = arith.cmpi sge, %107, %108 : vector<1x256xi32>
    %c1_i32_54 = arith.constant 1 : i32
    %110 = vector.broadcast %c1_i32_54 : i32 to vector<1x256xi32>
    %111 = arith.addi %23, %110 : vector<1x256xi32>
    %c15_i32_55 = arith.constant 15 : i32
    %112 = vector.broadcast %c15_i32_55 : i32 to vector<1x256xi32>
    %113 = arith.cmpi sle, %111, %112 : vector<1x256xi32>
    %114 = arith.andi %109, %113 : vector<1x256xi1>
    %cst_56 = arith.constant 0.000000e+00 : f32
    %115 = vector.shape_cast %114 : vector<1x256xi1> to vector<1x256xi1>
    %116 = vector.broadcast %115 : vector<1x256xi1> to vector<4x256xi1>
    %117 = vector.broadcast %cst_56 : f32 to vector<4x256xf32>
    %118 = arith.select %116, %105, %117 : vector<4x256xi1>, vector<4x256xf32>
    %c32 = arith.constant 32 : index
    %c0_57 = arith.constant 0 : index
    %119 = vector.load %arg6[%c32, %c0_57] : memref<40x256xf32, #tpu.memory_space<vmem>>, vector<4x256xf32>
    tpu.vector_store %arg6[%c32, %c0_57], %118 {strides = array<i32>} : memref<40x256xf32, #tpu.memory_space<vmem>>, vector<4x256xf32>,
    %cst_58 = arith.constant 0.000000e+00 : f32
    %120 = vector.broadcast %cst_58 : f32 to vector<4x256xf32>
    %c36 = arith.constant 36 : index
    %c0_59 = arith.constant 0 : index
    %121 = vector.load %arg6[%c36, %c0_59] : memref<40x256xf32, #tpu.memory_space<vmem>>, vector<4x256xf32>
    tpu.vector_store %arg6[%c36, %c0_59], %120 {strides = array<i32>} : memref<40x256xf32, #tpu.memory_space<vmem>>, vector<4x256xf32>,
    %c0_60 = arith.constant 0 : index
    %c0_61 = arith.constant 0 : index
    %122 = vector.load %arg2[%c0_60, %c0_61] : memref<8x41xf32, #tpu.memory_space<vmem>>, vector<8x40xf32>
    %c0_62 = arith.constant 0 : index
    %c40 = arith.constant 40 : index
    %123 = vector.load %arg2[%c0_62, %c40] : memref<8x41xf32, #tpu.memory_space<vmem>>, vector<8x1xf32>
    %c0_63 = arith.constant 0 : index
    %c0_64 = arith.constant 0 : index
    %124 = vector.load %arg6[%c0_63, %c0_64] : memref<40x256xf32, #tpu.memory_space<vmem>>, vector<40x256xf32>
    %cst_65 = arith.constant dense<0.000000e+00> : vector<8x256xf32>
    %125 = tpu.matmul %122, %124, %cst_65 {dimension_numbers = #tpu.dot_dimension_numbers<[1], [0], [0], [1], [0, 0, 1, 1], [], []>} : vector<8x40xf32>, vector<40x256xf32>, vector<8x256xf32> -> vector<8x256xf32>
    %126 = vector.broadcast %123 : vector<8x1xf32> to vector<8x256xf32>
    %127 = arith.addf %125, %126 : vector<8x256xf32>
    %c0_66 = arith.constant 0 : index
    %c0_67 = arith.constant 0 : index
    %c0_68 = arith.constant 0 : index
    %128 = vector.load %arg3[%c0_66, %c0_67, %c0_68] : memref<1x8x256xf32, #tpu.memory_space<vmem>>, vector<1x8x256xf32>
    %129 = vector.shape_cast %128 : vector<1x8x256xf32> to vector<8x256xf32>
    %130 = vector.shape_cast %127 : vector<8x256xf32> to vector<1x8x256xf32>
    tpu.vector_store %arg3[%c0_66, %c0_67, %c0_68], %130 {strides = array<i32>} : memref<1x8x256xf32, #tpu.memory_space<vmem>>, vector<1x8x256xf32>,
    %cst_69 = arith.constant dense<0.000000e+00> : vector<8xf32>
    %131 = vector.multi_reduction <add>, %127, %cst_69 [1] : vector<8x256xf32> to vector<8xf32>
    %132 = vector.shape_cast %131 : vector<8xf32> to vector<8x1xf32>
    %133 = arith.mulf %127, %127 : vector<8x256xf32>
    %cst_70 = arith.constant dense<0.000000e+00> : vector<8xf32>
    %134 = vector.multi_reduction <add>, %133, %cst_70 [1] : vector<8x256xf32> to vector<8xf32>
    %135 = vector.shape_cast %134 : vector<8xf32> to vector<8x1xf32>
    %136 = tpu.concatenate %132, %135 in 1 : vector<8x1xf32>, vector<8x1xf32> -> vector<8x2xf32>
    %c0_71 = arith.constant 0 : index
    %c0_72 = arith.constant 0 : index
    %c0_73 = arith.constant 0 : index
    %137 = vector.load %arg4[%c0_71, %c0_72, %c0_73] : memref<1x8x2xf32, #tpu.memory_space<vmem>>, vector<1x8x2xf32>
    %138 = vector.shape_cast %137 : vector<1x8x2xf32> to vector<8x2xf32>
    %139 = vector.shape_cast %136 : vector<8x2xf32> to vector<1x8x2xf32>
    tpu.vector_store %arg4[%c0_71, %c0_72, %c0_73], %139 {strides = array<i32>} : memref<1x8x2xf32, #tpu.memory_space<vmem>>, vector<1x8x2xf32>,
    return
  }
  func.func @transform_0(%arg0: i32) -> (i32, i32, i32) {
    %c0_i32 = arith.constant 0 : i32
    %c0_i32_0 = arith.constant 0 : i32
    %c0_i32_1 = arith.constant 0 : i32
    return %arg0, %c0_i32, %c0_i32_0 : i32, i32, i32
  }
  func.func @transform_1(%arg0: i32) -> (i32, i32) {
    %c0_i32 = arith.constant 0 : i32
    %c0_i32_0 = arith.constant 0 : i32
    %c0_i32_1 = arith.constant 0 : i32
    return %c0_i32, %c0_i32_0 : i32, i32
  }
  func.func @transform_2(%arg0: i32) -> (i32, i32, i32) {
    %c0_i32 = arith.constant 0 : i32
    %c0_i32_0 = arith.constant 0 : i32
    %c0_i32_1 = arith.constant 0 : i32
    return %arg0, %c0_i32, %c0_i32_0 : i32, i32, i32
  }
  func.func @transform_3(%arg0: i32) -> (i32, i32, i32) {
    %c0_i32 = arith.constant 0 : i32
    %c0_i32_0 = arith.constant 0 : i32
    %c0_i32_1 = arith.constant 0 : i32
    return %arg0, %c0_i32, %c0_i32_0 : i32, i32, i32
  }
}

module attributes {stable_mosaic.version = 11 : i64} {
  func.func @kernel(%arg0: i32, %arg1: i32, %arg2: memref<1x8x256xf32, #tpu.memory_space<vmem>>, %arg3: memref<8x2xf32, #tpu.memory_space<vmem>>, %arg4: memref<1x8x256xf32, #tpu.memory_space<vmem>>) attributes {dimension_semantics = [#tpu.dimension_semantics<parallel>, #tpu.dimension_semantics<parallel>], iteration_bounds = array<i64: 2, 1>, scalar_prefetch = 0 : i64, scratch_operands = 0 : i64, tpu.core_type = #tpu.core_type<tc>, window_params = [{transform_indices = @transform_0, window_bounds = array<i64: 1, 8, 256>}, {pipeline_mode = #tpu.pipeline_mode<synchronous>, transform_indices = @transform_1, window_bounds = array<i64: 8, 2>}, {transform_indices = @transform_2, window_bounds = array<i64: 1, 8, 256>}]} {
    %c0 = arith.constant 0 : index
    %c0_0 = arith.constant 0 : index
    %0 = vector.load %arg3[%c0, %c0_0] : memref<8x2xf32, #tpu.memory_space<vmem>>, vector<8x1xf32>
    %c0_1 = arith.constant 0 : index
    %c1 = arith.constant 1 : index
    %1 = vector.load %arg3[%c0_1, %c1] : memref<8x2xf32, #tpu.memory_space<vmem>>, vector<8x1xf32>
    %c0_2 = arith.constant 0 : index
    %c0_3 = arith.constant 0 : index
    %c0_4 = arith.constant 0 : index
    %2 = vector.load %arg2[%c0_2, %c0_3, %c0_4] : memref<1x8x256xf32, #tpu.memory_space<vmem>>, vector<1x8x256xf32>
    %3 = vector.shape_cast %2 : vector<1x8x256xf32> to vector<8x256xf32>
    %4 = vector.broadcast %0 : vector<8x1xf32> to vector<8x256xf32>
    %5 = arith.mulf %3, %4 : vector<8x256xf32>
    %6 = vector.broadcast %1 : vector<8x1xf32> to vector<8x256xf32>
    %7 = arith.addf %5, %6 : vector<8x256xf32>
    %8 = vector.extract_strided_slice %7 {offsets = [1, 0], sizes = [1, 256], strides = [1, 1]} : vector<8x256xf32> to vector<1x256xf32>
    %9 = vector.extract_strided_slice %7 {offsets = [0, 0], sizes = [1, 256], strides = [1, 1]} : vector<8x256xf32> to vector<1x256xf32>
    %10 = arith.subf %8, %9 : vector<1x256xf32>
    %11 = math.exp %10 : vector<1x256xf32>
    %cst = arith.constant 1.000000e+00 : f32
    %12 = vector.broadcast %cst : f32 to vector<1x256xf32>
    %13 = arith.addf %12, %11 : vector<1x256xf32>
    %cst_5 = arith.constant 1.000000e+00 : f32
    %14 = vector.broadcast %cst_5 : f32 to vector<1x256xf32>
    %15 = arith.divf %14, %13 : vector<1x256xf32>
    %cst_6 = arith.constant 1.000000e+00 : f32
    %16 = vector.broadcast %cst_6 : f32 to vector<1x256xf32>
    %17 = arith.subf %16, %15 : vector<1x256xf32>
    %18 = tpu.concatenate %15, %17 in 0 : vector<1x256xf32>, vector<1x256xf32> -> vector<2x256xf32>
    %19 = vector.extract_strided_slice %7 {offsets = [2, 0], sizes = [6, 256], strides = [1, 1]} : vector<8x256xf32> to vector<6x256xf32>
    %20 = tpu.concatenate %18, %19 in 0 : vector<2x256xf32>, vector<6x256xf32> -> vector<8x256xf32>
    %c0_7 = arith.constant 0 : index
    %c0_8 = arith.constant 0 : index
    %c0_9 = arith.constant 0 : index
    %21 = vector.load %arg4[%c0_7, %c0_8, %c0_9] : memref<1x8x256xf32, #tpu.memory_space<vmem>>, vector<1x8x256xf32>
    %22 = vector.shape_cast %21 : vector<1x8x256xf32> to vector<8x256xf32>
    %23 = vector.shape_cast %20 : vector<8x256xf32> to vector<1x8x256xf32>
    tpu.vector_store %arg4[%c0_7, %c0_8, %c0_9], %23 {strides = array<i32>} : memref<1x8x256xf32, #tpu.memory_space<vmem>>, vector<1x8x256xf32>,
    return
  }
  func.func @transform_0(%arg0: i32, %arg1: i32) -> (i32, i32, i32) {
    %c0_i32 = arith.constant 0 : i32
    %c0_i32_0 = arith.constant 0 : i32
    return %arg0, %c0_i32, %arg1 : i32, i32, i32
  }
  func.func @transform_1(%arg0: i32, %arg1: i32) -> (i32, i32) {
    %c0_i32 = arith.constant 0 : i32
    %c0_i32_0 = arith.constant 0 : i32
    %c0_i32_1 = arith.constant 0 : i32
    return %c0_i32, %c0_i32_0 : i32, i32
  }
  func.func @transform_2(%arg0: i32, %arg1: i32) -> (i32, i32, i32) {
    %c0_i32 = arith.constant 0 : i32
    %c0_i32_0 = arith.constant 0 : i32
    return %arg0, %c0_i32, %arg1 : i32, i32, i32
  }
}

</mosaic_0001>

<llo_original>
// kernel: detection_block_forward.3
$region0: #{detection_block_forward.3}
  #allocation0 [shape = 'u32[]', space=smem, size = 0x4, offset = 0x4, fixed_abs, tag = 'smem constant byte address 0x4 - core index']
  #allocation1 [shape = 'u32[144,128]{1,0:T(1,128)}', space=vmem, size = 0x12000, scoped, tag = 'internal scratch']
  %s0 = inlined_call_operand.vmem [shape: f32[2,8,256], index: 0, kind: input, shape index: {}, may-alias: {0,2}]
  %s1 = inlined_call_operand.vmem [shape: f32[8,2], index: 1, kind: input, shape index: {}]
  %s2 = inlined_call_operand.vmem [shape: f32[2,8,256], index: 2, kind: output, shape index: {}, may-alias: {0,2}]
  %s3 = sld [smem:[#allocation0]]
  $region41: #{detection_block_forward.3} parent=0
    _
  %s5 = ssub.s32 1, %s3
  %s6 = scalar_select 0, %s5, %s3
  loop: start=0, step=1, limit=4
  $region2: #{detection_block_forward.3} parent=0 // loop_pre_header
    _
  $region3: #{detection_block_forward.3} parent=0 // loop_header
    %s8 = sphi 0, %s12
    %p9 = scmp.ge.s32.totalorder %s8, 4
    %s15 = sphi 0, %s27
    %s16 = sphi 0, %s23
    %s17 = sphi 0, %s15
    %s18 = sphi 0, %s16
    %s19 = sphi 0, %s17
    %s20 = sphi 0, %s18
    %s32 = sphi 0, %s34
    %s35 = sphi 0, %s32
    %s36 = sphi 0, %s35
    %s52 = sphi 0, %s36
    %s56 = sphi 0, %s56
    %s58 = sphi 0, %s56
    %s59 = sphi 0, %s58
    %s73 = sphi 0, %s59
    %s81 = sphi 0, %s83
    %s84 = sphi 0, %s81
    %s85 = sphi 0, %s84
    %s101 = sphi 0, %s85
  $region4: #{detection_block_forward.3} parent=0 // loop_header_branch
    %11 = sbr.rel (%p9) target = $region8
  $region5: #{detection_block_forward.3} parent=0 // loop_body
    %s13 = ssub.s32 %s8, 1
    %s14 = ssub.s32 %s8, 2
    %s21 = sadd.s32 1, %s16
    %p22 = scmp.ge.s32.totalorder %s21, 1
    %s23 = scalar_select %p22, 0, %s21
    %s24 = sadd.s32 1, %s15
    %s25 = scalar_select %p22, %s24, %s15
    %p26 = scmp.ge.s32.totalorder %s25, 2
    %s27 = scalar_select %p26, 0, %s25
    %s28 = ssub.s32 %s15, %s27
    %s29 = ssub.s32 %s16, %s23
    %s30 = sor.u32 %s28, %s29
    %p31 = scmp.eq.s32.totalorder %s30, 0
    %s33 = sadd.s32 %s32, 1
    %s34 = scalar_select %p31, %s32, %s33
    %p37 = pneg %p31
    %p38 = scmp.eq.s32.totalorder %s8, 1
    %p39 = por %p37, %p38
    %p40 = scmp.ne.s32.totalorder %s32, %s35
    %p41 = scmp.eq.s32.totalorder %s8, 0
    %p42 = por %p40, %p41
    %p43 = scmp.ne.s32.totalorder %s32, %s35
    %p44 = scmp.eq.s32.totalorder %s13, 1
    %p45 = por %p43, %p44
    %p46 = scmp.ne.s32.totalorder %s35, %s36
    %p47 = scmp.eq.s32.totalorder %s13, 0
    %p48 = por %p46, %p47
    %p49 = scmp.ne.s32.totalorder %s35, %s36
    %p50 = scmp.eq.s32.totalorder %s14, 1
    %p51 = por %p49, %p50
    %p53 = scmp.ne.s32.totalorder %s36, %s52
    %p54 = scmp.eq.s32.totalorder %s14, 0
    %p55 = por %p53, %p54
    %s57 = sadd.s32 %s56, 1
    %p60 = scmp.eq.s32.totalorder %s8, 1
    %p61 = scmp.ne.s32.totalorder %s56, %s58
    %p62 = scmp.eq.s32.totalorder %s8, 0
    %p63 = por %p61, %p62
    %p64 = scmp.ne.s32.totalorder %s56, %s58
    %p65 = scmp.eq.s32.totalorder %s13, 1
    %p66 = por %p64, %p65
    %p67 = scmp.ne.s32.totalorder %s58, %s59
    %p68 = scmp.eq.s32.totalorder %s13, 0
    %p69 = por %p67, %p68
    %p70 = scmp.ne.s32.totalorder %s58, %s59
    %p71 = scmp.eq.s32.totalorder %s14, 1
    %p72 = por %p70, %p71
    %p74 = scmp.ne.s32.totalorder %s59, %s73
    %p75 = scmp.eq.s32.totalorder %s14, 0
    %p76 = por %p74, %p75
    %s77 = ssub.s32 %s15, %s27
    %s78 = ssub.s32 %s16, %s23
    %s79 = sor.u32 %s77, %s78
    %p80 = scmp.eq.s32.totalorder %s79, 0
    %s82 = sadd.s32 %s81, 1
    %s83 = scalar_select %p80, %s81, %s82
    %p86 = pneg %p80
    %p87 = scmp.eq.s32.totalorder %s8, 1
    %p88 = por %p86, %p87
    %p89 = scmp.ne.s32.totalorder %s81, %s84
    %p90 = scmp.eq.s32.totalorder %s8, 0
    %p91 = por %p89, %p90
    %p92 = scmp.ne.s32.totalorder %s81, %s84
    %p93 = scmp.eq.s32.totalorder %s13, 1
    %p94 = por %p92, %p93
    %p95 = scmp.ne.s32.totalorder %s84, %s85
    %p96 = scmp.eq.s32.totalorder %s13, 0
    %p97 = por %p95, %p96
    %p98 = scmp.ne.s32.totalorder %s84, %s85
    %p99 = scmp.eq.s32.totalorder %s14, 1
    %p100 = por %p98, %p99
    %p102 = scmp.ne.s32.totalorder %s85, %s101
    %p103 = scmp.eq.s32.totalorder %s14, 0
    %p104 = por %p102, %p103
    %p105 = scmp.le.s32.totalorder 1, %s8
    %p106 = scmp.lt.s32.totalorder %s8, 3
    %p107 = pnand %p105, %p106
    %p108 = pneg %p107
    // Predicated region
    $region9: #{detection_block_forward.3} parent=5 // pred_check
      _
    $region10: #{detection_block_forward.3} parent=5 // pred_check_branch
      %110 = sbr.rel (%p107) target = $region12
    $region11: #{detection_block_forward.3} parent=5 // pred_region
      %s111 = ssub.s32 %s8, 1
      // Predicated region
      $region13: #{detection_block_forward.3} parent=11 // pred_check
        %p112 = pneg %p69
      $region14: #{detection_block_forward.3} parent=11 // pred_check_branch
        %114 = sbr.rel (%p112) target = $region16
      $region15: #{detection_block_forward.3} parent=11 // pred_region
        _
      $region16: #{detection_block_forward.3} parent=11 // pred_fallthru
        _
    $region12: #{detection_block_forward.3} parent=5 // pred_fallthru
      _
    %p115 = scmp.lt.s32.totalorder %s8, 2
    // Predicated region
    $region17: #{detection_block_forward.3} parent=5 // pred_check
      %p116 = pneg %p115
    $region18: #{detection_block_forward.3} parent=5 // pred_check_branch
      %118 = sbr.rel (%p116) target = $region20
    $region19: #{detection_block_forward.3} parent=5 // pred_region
      // Predicated region
      $region21: #{detection_block_forward.3} parent=19 // pred_check
        %p119 = pneg %p42
      $region22: #{detection_block_forward.3} parent=19 // pred_check_branch
        %121 = sbr.rel (%p119) target = $region24
      $region23: #{detection_block_forward.3} parent=19 // pred_region
        %s122 = smul.u32 2, %s16
        %p123 = scmp.lt.s32.totalorder %s15, 1
        %s124 = scalar_select %p123, %s15, 1
        %p125 = scmp.lt.s32.totalorder %s122, 1
        %s126 = scalar_select %p125, %s122, 1
        %s127 = smul.addr %s124, 2
        %s128 = sadd.s32 %s126, %s127
        %s129 = smul.addr %s128, 8
        %s130 = scalar_lea.vmem %s0, %s129
        %s131 = smul.u32 2, %s16
      $region24: #{detection_block_forward.3} parent=19 // pred_fallthru
        _
    $region20: #{detection_block_forward.3} parent=5 // pred_fallthru
      _
    %p132 = scmp.le.s32.totalorder 1, %s8
    %p133 = scmp.lt.s32.totalorder %s8, 3
    %p134 = pnand %p132, %p133
    %p135 = pneg %p134
    // Predicated region
    $region25: #{detection_block_forward.3} parent=5 // pred_check
      _
    $region26: #{detection_block_forward.3} parent=5 // pred_check_branch
      %137 = sbr.rel (%p134) target = $region28
    $region27: #{detection_block_forward.3} parent=5 // pred_region
      %s138 = ssub.s32 %s8, 1
      %s139 = smul.u32 2, %s18
      %p140 = scmp.lt.s32.totalorder %s17, 1
      %s141 = scalar_select %p140, %s17, 1
      %p142 = scmp.lt.s32.totalorder %s139, 1
      %s143 = scalar_select %p142, %s139, 1
      %s144 = smul.addr %s141, 2
      %s145 = sadd.s32 %s143, %s144
      %s146 = smul.addr %s145, 8
      %s147 = scalar_lea.vmem %s0, %s146
      %p148 = pneg %p48
      %p149 = pneg %p45
      %p150 = pneg %p69
      %p151 = pneg %p66
      %p152 = pneg %p97
      %p153 = pneg %p94
      %s154 = smul.u32 2, %s18
      %p155 = scmp.lt.s32.totalorder %s17, 1
      %s156 = scalar_select %p155, %s17, 1
      %p157 = scmp.lt.s32.totalorder %s154, 1
      %s158 = scalar_select %p157, %s154, 1
      %s159 = smul.addr %s156, 2
      %s160 = sadd.s32 %s158, %s159
      %s161 = smul.addr %s160, 8
      %s162 = scalar_lea.vmem %s2, %s161
      %s163 = smul.u32 2, %s18
      %p164 = scmp.lt.s32.totalorder %s17, 1
      %s165 = scalar_select %p164, %s17, 1
      %p166 = scmp.lt.s32.totalorder %s163, 1
      %s167 = scalar_select %p166, %s163, 1
      %s168 = smul.addr %s165, 2
      %s169 = sadd.s32 %s167, %s168
      %s170 = smul.addr %s169, 8
      %s171 = scalar_lea.vmem %s0, %s170
      %s172 = smul.u32 2, %s18
      %s173 = smul.u32 2, %s18
      %p174 = scmp.lt.s32.totalorder %s17, 1
      %s175 = scalar_select %p174, %s17, 1
      %p176 = scmp.lt.s32.totalorder %s173, 1
      %s177 = scalar_select %p176, %s173, 1
      %s178 = smul.addr %s175, 2
      %s179 = sadd.s32 %s177, %s178
      %s180 = smul.addr %s179, 8
      %s181 = scalar_lea.vmem %s2, %s180
      %s182 = smul.u32 2, %s18
      %v183 = vld [vmem:[%s1] sm:$0xff]
      %v184 = vld [vmem:[%s171] sm:$0xff]
      %v185 = vld [vmem:[%s171 + $0x8] sm:$0xff]
      %187 = vset.pattern.permute.xlu0 0
      %188 = vperm.xlu0 %187, %v183
      %v189 = vpop.permute.xlu0 %188
      %v191 = vmul.f32 %v184, %v189
      %v192 = vmul.f32 %v185, %v189
      %193 = vset.pattern.permute.xlu0 1
      %194 = vperm.xlu0 %193, %v183
      %v195 = vpop.permute.xlu0 %194
      %v197 = vadd.f32 %v191, %v195
      %v198 = vadd.f32 %v192, %v195
      %v201 = vrot.slane %v197, 7
      %v202 = vrot.slane %v198, 7
      %v205 = vsub.f32 %v197, %v201
      %v206 = vsub.f32 %v198, %v202
      %v207 = vmul.f32 %v205, 1.442695
      %v208 = vpow.pop %v207
      %v209 = vmul.f32 %v206, 1.442695
      %v210 = vpow.pop %v209
      %v211 = vadd.f32 %v208, 1.0
      %v212 = vadd.f32 %v210, 1.0
      %v213 = vrcp.pop %v211
      %v214 = vmul.f32 1.0, %v213
      %v215 = vrcp.pop %v212
      %v216 = vmul.f32 1.0, %v215
      %v217 = vsub.f32 1.0, %v214
      %v218 = vsub.f32 1.0, %v216
      %v221 = vrot.slane %v214, 1
      %v222 = vrot.slane %v216, 1
      %vm225 = vcmask 1040384
      %v226 = vsel %vm225, %v221, %v217
      %v227 = vsel %vm225, %v222, %v218
      %vm228 = vcmask 1041408
      %v229 = vsel %vm228, %v226, %v197
      %v230 = vsel %vm228, %v227, %v198
      %231 = vst [vmem:[%s181] sm:$0xff] %v229
      %232 = vst [vmem:[%s181 + $0x8] sm:$0xff] %v230
      %s233 = smul.u32 2, %s18
      %p234 = scmp.lt.s32.totalorder %s17, 1
      %s235 = scalar_select %p234, %s17, 1
      %p236 = scmp.lt.s32.totalorder %s233, 1
      %s237 = scalar_select %p236, %s233, 1
      %s238 = smul.addr %s235, 2
      %s239 = sadd.s32 %s237, %s238
      %s240 = smul.addr %s239, 8
      %s241 = scalar_lea.vmem %s2, %s240
      // Predicated region
      $region29: #{detection_block_forward.3} parent=27 // pred_check
        %p242 = pneg %p94
      $region30: #{detection_block_forward.3} parent=27 // pred_check_branch
        %244 = sbr.rel (%p242) target = $region32
      $region31: #{detection_block_forward.3} parent=27 // pred_region
        %s245 = smul.u32 2, %s18
      $region32: #{detection_block_forward.3} parent=27 // pred_fallthru
        _
    $region28: #{detection_block_forward.3} parent=5 // pred_fallthru
      _
    %p246 = scmp.le.s32.totalorder 2, %s8
    // Predicated region
    $region33: #{detection_block_forward.3} parent=5 // pred_check
      %p247 = pneg %p246
    $region34: #{detection_block_forward.3} parent=5 // pred_check_branch
      %249 = sbr.rel (%p247) target = $region36
    $region35: #{detection_block_forward.3} parent=5 // pred_region
      %s250 = ssub.s32 %s8, 2
      // Predicated region
      $region37: #{detection_block_forward.3} parent=35 // pred_check
        %p251 = pneg %p100
      $region38: #{detection_block_forward.3} parent=35 // pred_check_branch
        %253 = sbr.rel (%p251) target = $region40
      $region39: #{detection_block_forward.3} parent=35 // pred_region
        %s254 = smul.u32 2, %s20
        %p255 = scmp.lt.s32.totalorder %s19, 1
        %s256 = scalar_select %p255, %s19, 1
        %p257 = scmp.lt.s32.totalorder %s254, 1
        %s258 = scalar_select %p257, %s254, 1
        %s259 = smul.addr %s256, 2
        %s260 = sadd.s32 %s258, %s259
        %s261 = smul.addr %s260, 8
        %s262 = scalar_lea.vmem %s2, %s261
      $region40: #{detection_block_forward.3} parent=35 // pred_fallthru
        _
    $region36: #{detection_block_forward.3} parent=5 // pred_fallthru
      _
  $region6: #{detection_block_forward.3} parent=0 // loop_footer
    %s12 = sadd.s32 1, %s8
  $region7: #{detection_block_forward.3} parent=0 // loop_footer_branch
    %7 = sbr.rel target = $region3
  $region8: #{detection_block_forward.3} parent=0 // loop_exit
    _

// kernel: detection_block_forward.2
$region0: #{detection_block_forward.2}
  #allocation0 [shape = 'u32[]', space=smem, size = 0x4, offset = 0x4, fixed_abs, tag = 'smem constant byte address 0x4 - core index']
  #allocation1 [shape = 'u32[144,128]{1,0:T(1,128)}', space=vmem, size = 0x12000, scoped, tag = 'internal scratch']
  #allocation2 [shape = 'f32[4,401]{1,0:T(4,128)}', space=vmem, size = 0x2000, scoped, tag = 'scratch operand']
  #allocation3 [shape = 'f32[40,256]{1,0:T(8,128)}', space=vmem, size = 0xa000, scoped, tag = 'scratch operand']
  %s0 = inlined_call_operand.vmem [shape: f32[2,4,256], index: 0, kind: input, shape index: {}]
  %s1 = inlined_call_operand.vmem [shape: f32[8,41], index: 1, kind: input, shape index: {}]
  %s2 = inlined_call_operand.vmem [shape: f32[2,8,256], index: 2, kind: output, shape index: {0}]
  %s3 = inlined_call_operand.vmem [shape: f32[2,8,2], index: 3, kind: output, shape index: {1}]
  %4 = xla_tuple %s2, %s3
  %s5 = sld [smem:[#allocation0]]
  $region49: #{detection_block_forward.2} parent=0
    _
  %s7 = ssub.s32 1, %s5
  %s8 = scalar_select 0, %s7, %s5
  loop: start=0, step=1, limit=4
  $region2: #{detection_block_forward.2} parent=0 // loop_pre_header
    _
  $region3: #{detection_block_forward.2} parent=0 // loop_header
    %s10 = sphi 0, %s14
    %p11 = scmp.ge.s32.totalorder %s10, 4
    %s20 = sphi 0, %s22
    %s23 = sphi 0, %s20
    %s24 = sphi 0, %s23
    %s40 = sphi 0, %s24
    %s44 = sphi 0, %s44
    %s46 = sphi 0, %s44
    %s47 = sphi 0, %s46
    %s61 = sphi 0, %s47
    %s67 = sphi 0, %s69
    %s70 = sphi 0, %s67
    %s71 = sphi 0, %s70
    %s87 = sphi 0, %s71
    %s93 = sphi 0, %s95
    %s96 = sphi 0, %s93
    %s97 = sphi 0, %s96
    %s113 = sphi 0, %s97
  $region4: #{detection_block_forward.2} parent=0 // loop_header_branch
    %13 = sbr.rel (%p11) target = $region8
  $region5: #{detection_block_forward.2} parent=0 // loop_body
    %s15 = ssub.s32 %s10, 1
    %s16 = ssub.s32 %s10, 2
    %s17 = sadd.s32 %s10, 1
    %s18 = ssub.s32 %s10, %s17
    %p19 = scmp.eq.s32.totalorder %s18, 0
    %s21 = sadd.s32 %s20, 1
    %s22 = scalar_select %p19, %s20, %s21
    %p25 = pneg %p19
    %p26 = scmp.eq.s32.totalorder %s10, 1
    %p27 = por %p25, %p26
    %p28 = scmp.ne.s32.totalorder %s20, %s23
    %p29 = scmp.eq.s32.totalorder %s10, 0
    %p30 = por %p28, %p29
    %p31 = scmp.ne.s32.totalorder %s20, %s23
    %p32 = scmp.eq.s32.totalorder %s15, 1
    %p33 = por %p31, %p32
    %p34 = scmp.ne.s32.totalorder %s23, %s24
    %p35 = scmp.eq.s32.totalorder %s15, 0
    %p36 = por %p34, %p35
    %p37 = scmp.ne.s32.totalorder %s23, %s24
    %p38 = scmp.eq.s32.totalorder %s16, 1
    %p39 = por %p37, %p38
    %p41 = scmp.ne.s32.totalorder %s24, %s40
    %p42 = scmp.eq.s32.totalorder %s16, 0
    %p43 = por %p41, %p42
    %s45 = sadd.s32 %s44, 1
    %p48 = scmp.eq.s32.totalorder %s10, 1
    %p49 = scmp.ne.s32.totalorder %s44, %s46
    %p50 = scmp.eq.s32.totalorder %s10, 0
    %p51 = por %p49, %p50
    %p52 = scmp.ne.s32.totalorder %s44, %s46
    %p53 = scmp.eq.s32.totalorder %s15, 1
    %p54 = por %p52, %p53
    %p55 = scmp.ne.s32.totalorder %s46, %s47
    %p56 = scmp.eq.s32.totalorder %s15, 0
    %p57 = por %p55, %p56
    %p58 = scmp.ne.s32.totalorder %s46, %s47
    %p59 = scmp.eq.s32.totalorder %s16, 1
    %p60 = por %p58, %p59
    %p62 = scmp.ne.s32.totalorder %s47, %s61
    %p63 = scmp.eq.s32.totalorder %s16, 0
    %p64 = por %p62, %p63
    %s65 = ssub.s32 %s10, %s17
    %p66 = scmp.eq.s32.totalorder %s65, 0
    %s68 = sadd.s32 %s67, 1
    %s69 = scalar_select %p66, %s67, %s68
    %p72 = pneg %p66
    %p73 = scmp.eq.s32.totalorder %s10, 1
    %p74 = por %p72, %p73
    %p75 = scmp.ne.s32.totalorder %s67, %s70
    %p76 = scmp.eq.s32.totalorder %s10, 0
    %p77 = por %p75, %p76
    %p78 = scmp.ne.s32.totalorder %s67, %s70
    %p79 = scmp.eq.s32.totalorder %s15, 1
    %p80 = por %p78, %p79
    %p81 = scmp.ne.s32.totalorder %s70, %s71
    %p82 = scmp.eq.s32.totalorder %s15, 0
    %p83 = por %p81, %p82
    %p84 = scmp.ne.s32.totalorder %s70, %s71
    %p85 = scmp.eq.s32.totalorder %s16, 1
    %p86 = por %p84, %p85
    %p88 = scmp.ne.s32.totalorder %s71, %s87
    %p89 = scmp.eq.s32.totalorder %s16, 0
    %p90 = por %p88, %p89
    %s91 = ssub.s32 %s10, %s17
    %p92 = scmp.eq.s32.totalorder %s91, 0
    %s94 = sadd.s32 %s93, 1
    %s95 = scalar_select %p92, %s93, %s94
    %p98 = pneg %p92
    %p99 = scmp.eq.s32.totalorder %s10, 1
    %p100 = por %p98, %p99
    %p101 = scmp.ne.s32.totalorder %s93, %s96
    %p102 = scmp.eq.s32.totalorder %s10, 0
    %p103 = por %p101, %p102
    %p104 = scmp.ne.s32.totalorder %s93, %s96
    %p105 = scmp.eq.s32.totalorder %s15, 1
    %p106 = por %p104, %p105
    %p107 = scmp.ne.s32.totalorder %s96, %s97
    %p108 = scmp.eq.s32.totalorder %s15, 0
    %p109 = por %p107, %p108
    %p110 = scmp.ne.s32.totalorder %s96, %s97
    %p111 = scmp.eq.s32.totalorder %s16, 1
    %p112 = por %p110, %p111
    %p114 = scmp.ne.s32.totalorder %s97, %s113
    %p115 = scmp.eq.s32.totalorder %s16, 0
    %p116 = por %p114, %p115
    %p117 = scmp.le.s32.totalorder 1, %s10
    %p118 = scmp.lt.s32.totalorder %s10, 3
    %p119 = pnand %p117, %p118
    %p120 = pneg %p119
    // Predicated region
    $region9: #{detection_block_forward.2} parent=5 // pred_check
      _
    $region10: #{detection_block_forward.2} parent=5 // pred_check_branch
      %122 = sbr.rel (%p119) target = $region12
    $region11: #{detection_block_forward.2} parent=5 // pred_region
      %s123 = ssub.s32 %s10, 1
      // Predicated region
      $region13: #{detection_block_forward.2} parent=11 // pred_check
        %p124 = pneg %p57
      $region14: #{detection_block_forward.2} parent=11 // pred_check_branch
        %126 = sbr.rel (%p124) target = $region16
      $region15: #{detection_block_forward.2} parent=11 // pred_region
        _
      $region16: #{detection_block_forward.2} parent=11 // pred_fallthru
        _
    $region12: #{detection_block_forward.2} parent=5 // pred_fallthru
      _
    %p127 = scmp.lt.s32.totalorder %s10, 2
    // Predicated region
    $region17: #{detection_block_forward.2} parent=5 // pred_check
      %p128 = pneg %p127
    $region18: #{detection_block_forward.2} parent=5 // pred_check_branch
      %130 = sbr.rel (%p128) target = $region20
    $region19: #{detection_block_forward.2} parent=5 // pred_region
      // Predicated region
      $region21: #{detection_block_forward.2} parent=19 // pred_check
        %p131 = pneg %p30
      $region22: #{detection_block_forward.2} parent=19 // pred_check_branch
        %133 = sbr.rel (%p131) target = $region24
      $region23: #{detection_block_forward.2} parent=19 // pred_region
        %p134 = scmp.lt.s32.totalorder %s10, 1
        %s135 = scalar_select %p134, %s10, 1
        %s136 = smul.addr %s135, 2
        %s137 = smul.addr %s136, 4
        %s138 = scalar_lea.vmem %s0, %s137
      $region24: #{detection_block_forward.2} parent=19 // pred_fallthru
        _
    $region20: #{detection_block_forward.2} parent=5 // pred_fallthru
      _
    %p139 = scmp.le.s32.totalorder 1, %s10
    %p140 = scmp.lt.s32.totalorder %s10, 3
    %p141 = pnand %p139, %p140
    %p142 = pneg %p141
    // Predicated region
    $region25: #{detection_block_forward.2} parent=5 // pred_check
      _
    $region26: #{detection_block_forward.2} parent=5 // pred_check_branch
      %144 = sbr.rel (%p141) target = $region28
    $region27: #{detection_block_forward.2} parent=5 // pred_region
      %s145 = ssub.s32 %s10, 1
      %p146 = scmp.lt.s32.totalorder %s15, 1
      %s147 = scalar_select %p146, %s15, 1
      %s148 = smul.addr %s147, 2
      %s149 = smul.addr %s148, 4
      %s150 = scalar_lea.vmem %s0, %s149
      %p151 = pneg %p36
      %p152 = pneg %p33
      %p153 = pneg %p57
      %p154 = pneg %p54
      %p155 = pneg %p83
      %p156 = pneg %p80
      %p157 = scmp.lt.s32.totalorder %s15, 1
      %s158 = scalar_select %p157, %s15, 1
      %s159 = smul.addr %s158, 2
      %s160 = smul.addr %s159, 8
      %s161 = scalar_lea.vmem %s2, %s160
      %p162 = pneg %p109
      %p163 = pneg %p106
      %p164 = scmp.lt.s32.totalorder %s15, 1
      %s165 = scalar_select %p164, %s15, 1
      %s166 = smul.addr %s165, 8
      %s167 = scalar_lea.vmem %s3, %s166
      %p168 = scmp.lt.s32.totalorder %s15, 1
      %s169 = scalar_select %p168, %s15, 1
      %s170 = smul.addr %s169, 2
      %s171 = smul.addr %s170, 4
      %s172 = scalar_lea.vmem %s0, %s171
      %p173 = scmp.lt.s32.totalorder %s15, 1
      %s174 = scalar_select %p173, %s15, 1
      %s175 = smul.addr %s174, 2
      %s176 = smul.addr %s175, 8
      %s177 = scalar_lea.vmem %s2, %s176
      %p178 = scmp.lt.s32.totalorder %s15, 1
      %s179 = scalar_select %p178, %s15, 1
      %s180 = smul.addr %s179, 8
      %s181 = scalar_lea.vmem %s3, %s180
      %182 = vst [vmem:[#allocation2] sm:$0xf] 0.0
      %vm183 = vcmask 134144
      %184 = vst.msk [vmem:[#allocation2 + $0xc] sm:$0xf] %vm183, 0.0
      %v185 = vld [vmem:[%s172] sm:$0xff]
      %186 = vst [vmem:[#allocation2 + $0x4] sm:$0xff] %v185
      %v187 = vlaneseq
      %v188 = vand.u32 %v187, 127
      %v189 = vadd.s32 %v188, 128
      %vm190 = vcmp.lt.s32.totalorder %v188, 0
      %v191 = vsub.s32 0, %v188
      %v192 = vsel %vm190, %v191, %v188
      %v193 = vshrl.u32 %v192, 4
      %v194 = vand.u32 %v192, 15
      %v195 = vsub.s32 0, %v194
      %v196 = vsel %vm190, %v195, %v194
      %vm197 = vcmp.lt.s32.totalorder %v189, 0
      %v198 = vsub.s32 0, %v189
      %v199 = vsel %vm197, %v198, %v189
      %v200 = vshrl.u32 %v199, 4
      %v201 = vand.u32 %v199, 15
      %v202 = vsub.s32 0, %v201
      %v203 = vsel %vm197, %v202, %v201
      %vm204 = vcmp.ne.s32.totalorder %v196, 0
      %vm205 = vcmp.ne.s32.totalorder %v203, 0
      %vm206 = vcmp.lt.s32.totalorder %v196, 0
      %vm207 = vcmp.lt.s32.totalorder %v203, 0
      %vm208 = vmand %vm206, %vm204
      %vm209 = vmand %vm207, %vm205
      %v210 = vadd.s32 %v196, 16
      %v211 = vadd.s32 %v203, 16
      %v212 = vsel %vm208, %v210, %v196
      %v213 = vsel %vm209, %v211, %v203
      %v214 = vld [vmem:[#allocation2] sm:$0xff]
      %v215 = vld [vmem:[#allocation2 + $0x8] sm:$0xf]
      %v216 = vadd.s32 %v212, 4294967295
      %v217 = vadd.s32 %v213, 4294967295
      %vm218 = vcmp.ge.s32.totalorder %v216, 0
      %vm219 = vcmp.ge.s32.totalorder %v217, 0
      %vm220 = vcmp.le.s32.totalorder %v216, 15
      %vm221 = vcmp.le.s32.totalorder %v217, 15
      %vm222 = vmand %vm218, %vm220
      %vm223 = vmand %vm219, %vm221
      %v224 = vsel %vm222, 1, 0
      %v225 = vsel %vm223, 1, 0
      %vm226 = vcmp.eq.s32.totalorder %v224, 1
      %vm227 = vcmp.eq.s32.totalorder %v225, 1
      %v230 = vcombine.high %v214, %v214
      %231 = vrot.lane.b32.xlu0 %v214, 17
      %v232 = vpop.permute.xlu0 %231
      %233 = vrot.lane.b32.xlu0 %v230, 17
      %v234 = vpop.permute.xlu0 %233
      %235 = vrot.lane.b32.xlu0 %v215, 17
      %v236 = vpop.permute.xlu0 %235
      %vm237 = vcmask 138240
      %v238 = vsel %vm237, %v232, %v234
      %v239 = vsel %vm237, %v234, %v236
      %v242 = vsel %vm226, %v238, 0.0
      %v243 = vsel %vm227, %v239, 0.0
      %244 = vst [vmem:[#allocation3] sm:$0xf] %v242
      %245 = vst [vmem:[#allocation3 + $0x8] sm:$0xf] %v243
      %v246 = vld [vmem:[#allocation2] sm:$0xff]
      %v247 = vld [vmem:[#allocation2 + $0x8] sm:$0xf]
      %v250 = vcombine.low %v246, %v246
      %v251 = vcombine.low %v247, %v247
      %252 = vrot.lane.b32.xlu0 %v250, 16
      %v253 = vpop.permute.xlu0 %252
      %254 = vrot.lane.b32.xlu0 %v246, 16
      %v255 = vpop.permute.xlu0 %254
      %256 = vrot.lane.b32.xlu0 %v251, 16
      %v257 = vpop.permute.xlu0 %256
      %vm258 = vcmask 130048
      %v259 = vsel %vm258, %v253, %v255
      %v260 = vsel %vm258, %v255, %v257
      %263 = vst [vmem:[#allocation3] sm:$0xf0] %v259
      %264 = vst [vmem:[#allocation3 + $0x8] sm:$0xf0] %v260
      %v265 = vld [vmem:[#allocation2] sm:$0xff]
      %v266 = vld [vmem:[#allocation2 + $0x8] sm:$0xf]
      %v267 = vadd.s32 %v212, 1
      %v268 = vadd.s32 %v213, 1
      %vm269 = vcmp.ge.s32.totalorder %v267, 0
      %vm270 = vcmp.ge.s32.totalorder %v268, 0
      %vm271 = vcmp.le.s32.totalorder %v267, 15
      %vm272 = vcmp.le.s32.totalorder %v268, 15
      %vm273 = vmand %vm269, %vm271
      %vm274 = vmand %vm270, %vm272
      %v275 = vsel %vm273, 1, 0
      %v276 = vsel %vm274, 1, 0
      %vm277 = vcmp.eq.s32.totalorder %v275, 1
      %vm278 = vcmp.eq.s32.totalorder %v276, 1
      %v281 = vcombine.high %v265, %v265
      %282 = vrot.lane.b32.xlu0 %v265, 15
      %v283 = vpop.permute.xlu0 %282
      %284 = vrot.lane.b32.xlu0 %v281, 15
      %v285 = vpop.permute.xlu0 %284
      %286 = vrot.lane.b32.xlu0 %v266, 15
      %v287 = vpop.permute.xlu0 %286
      %vm288 = vcmask 121856
      %v289 = vsel %vm288, %v283, %v285
      %v290 = vsel %vm288, %v285, %v287
      %v293 = vsel %vm277, %v289, 0.0
      %v294 = vsel %vm278, %v290, 0.0
      %295 = vst [vmem:[#allocation3 + $0x10] sm:$0xf] %v293
      %296 = vst [vmem:[#allocation3 + $0x18] sm:$0xf] %v294
      %v297 = vld [vmem:[#allocation2] sm:$0xff]
      %v298 = vld [vmem:[#allocation2 + $0x8] sm:$0xf]
      %v301 = vcombine.high %v297, %v297
      %302 = vrot.lane.b32.xlu0 %v297, 1
      %v303 = vpop.permute.xlu0 %302
      %304 = vrot.lane.b32.xlu0 %v301, 1
      %v305 = vpop.permute.xlu0 %304
      %306 = vrot.lane.b32.xlu0 %v298, 1
      %v307 = vpop.permute.xlu0 %306
      %vm308 = vcmask 7168
      %v309 = vsel %vm308, %v303, %v305
      %v310 = vsel %vm308, %v305, %v307
      %v313 = vsel %vm226, %v309, 0.0
      %v314 = vsel %vm227, %v310, 0.0
      %v317 = vrot.slane %v313, 4
      %v318 = vrot.slane %v314, 4
      %321 = vst [vmem:[#allocation3 + $0x10] sm:$0xf0] %v317
      %322 = vst [vmem:[#allocation3 + $0x18] sm:$0xf0] %v318
      %v323 = vld [vmem:[#allocation2 + $0x4] sm:$0xff]
      %v325 = vcombine.high %v323, %v323
      %327 = vst [vmem:[#allocation3 + $0x20] sm:$0xf] %v323
      %328 = vst [vmem:[#allocation3 + $0x28] sm:$0xf] %v325
      %v329 = vld [vmem:[#allocation2 + $0x4] sm:$0xff]
      %v330 = vld [vmem:[#allocation2 + $0xc] sm:$0xf]
      %v333 = vcombine.high %v329, %v329
      %334 = vrot.lane.b32.xlu0 %v329, 127
      %v335 = vpop.permute.xlu0 %334
      %336 = vrot.lane.b32.xlu0 %v333, 127
      %v337 = vpop.permute.xlu0 %336
      %338 = vrot.lane.b32.xlu0 %v330, 127
      %v339 = vpop.permute.xlu0 %338
      %vm340 = vcmask 1039360
      %v341 = vsel %vm340, %v335, %v337
      %v342 = vsel %vm340, %v337, %v339
      %v345 = vsel %vm277, %v341, 0.0
      %v346 = vsel %vm278, %v342, 0.0
      %v349 = vrot.slane %v345, 4
      %v350 = vrot.slane %v346, 4
      %353 = vst [vmem:[#allocation3 + $0x20] sm:$0xf0] %v349
      %354 = vst [vmem:[#allocation3 + $0x28] sm:$0xf0] %v350
      %v355 = vld [vmem:[#allocation2 + $0x4] sm:$0xff]
      %v356 = vld [vmem:[#allocation2 + $0xc] sm:$0xf]
      %v359 = vcombine.high %v355, %v355
      %360 = vrot.lane.b32.xlu0 %v355, 113
      %v361 = vpop.permute.xlu0 %360
      %362 = vrot.lane.b32.xlu0 %v359, 113
      %v363 = vpop.permute.xlu0 %362
      %364 = vrot.lane.b32.xlu0 %v356, 113
      %v365 = vpop.permute.xlu0 %364
      %vm366 = vcmask 924672
      %v367 = vsel %vm366, %v361, %v363
      %v368 = vsel %vm366, %v363, %v365
      %v371 = vsel %vm226, %v367, 0.0
      %v372 = vsel %vm227, %v368, 0.0
      %373 = vst [vmem:[#allocation3 + $0x30] sm:$0xf] %v371
      %374 = vst [vmem:[#allocation3 + $0x38] sm:$0xf] %v372
      %v375 = vld [vmem:[#allocation2 + $0x4] sm:$0xff]
      %v376 = vld [vmem:[#allocation2 + $0xc] sm:$0xf]
      %v379 = vcombine.low %v375, %v375
      %v380 = vcombine.low %v376, %v376
      %381 = vrot.lane.b32.xlu0 %v379, 112
      %v382 = vpop.permute.xlu0 %381
      %383 = vrot.lane.b32.xlu0 %v375, 112
      %v384 = vpop.permute.xlu0 %383
      %385 = vrot.lane.b32.xlu0 %v380, 112
      %v386 = vpop.permute.xlu0 %385
      %vm387 = vcmask 916480
      %v388 = vsel %vm387, %v382, %v384
      %v389 = vsel %vm387, %v384, %v386
      %392 = vst [vmem:[#allocation3 + $0x30] sm:$0xf0] %v388
      %393 = vst [vmem:[#allocation3 + $0x38] sm:$0xf0] %v389
      %v394 = vld [vmem:[#allocation2 + $0x4] sm:$0xff]
      %v395 = vld [vmem:[#allocation2 + $0xc] sm:$0xf]
      %v398 = vcombine.high %v394, %v394
      %399 = vrot.lane.b32.xlu0 %v394, 111
      %v400 = vpop.permute.xlu0 %399
      %401 = vrot.lane.b32.xlu0 %v398, 111
      %v402 = vpop.permute.xlu0 %401
      %403 = vrot.lane.b32.xlu0 %v395, 111
      %v404 = vpop.permute.xlu0 %403
      %vm405 = vcmask 908288
      %v406 = vsel %vm405, %v400, %v402
      %v407 = vsel %vm405, %v402, %v404
      %v410 = vsel %vm277, %v406, 0.0
      %v411 = vsel %vm278, %v407, 0.0
      %412 = vst [vmem:[#allocation3 + $0x40] sm:$0xf] %v410
      %413 = vst [vmem:[#allocation3 + $0x48] sm:$0xf] %v411
      %414 = vst [vmem:[#allocation3 + $0x40] sm:$0xf0] 0.0
      %415 = vst [vmem:[#allocation3 + $0x48] sm:$0xf0] 0.0
      %v416 = vld [vmem:[%s1] sm:$0xff]
      %v417 = vld [vmem:[#allocation3] sm:$0xff]
      %v418 = vld [vmem:[#allocation3 + $0x8] sm:$0xff]
      %v419 = vld [vmem:[#allocation3 + $0x10] sm:$0xff]
      %v420 = vld [vmem:[#allocation3 + $0x18] sm:$0xff]
      %v421 = vld [vmem:[#allocation3 + $0x20] sm:$0xff]
      %v422 = vld [vmem:[#allocation3 + $0x28] sm:$0xff]
      %v423 = vld [vmem:[#allocation3 + $0x30] sm:$0xff]
      %v424 = vld [vmem:[#allocation3 + $0x38] sm:$0xff]
      %v425 = vld [vmem:[#allocation3 + $0x40] sm:$0xff]
      %v426 = vld [vmem:[#allocation3 + $0x48] sm:$0xff]
      %428 = vset.pattern.permute.xlu0 40
      %429 = vperm.xlu0 %428, %v416
      %v430 = vpop.permute.xlu0 %429
      %vm432 = vcmask 326656
      %v433 = vsel %vm432, %v416, 0
      %435 = vmatprep.subr.mxu0 %v418
      %436 = vmatpush1.msra.mxu0 %v417
      %437 = vmatprep.subr.mxu0 %v420
      %438 = vmatpush1.msra.mxu0 %v419
      %439 = vmatprep.subr.mxu0 %v422
      %440 = vmatpush1.msra.mxu0 %v421
      %441 = vmatprep.subr.mxu0 %v424
      %442 = vmatpush1.msra.mxu0 %v423
      %443 = vmatprep.subr.mxu0 %v426
      %444 = vmatpush1.msra.mxu0 %v425
      %445 = vmatprep.subr.mxu0 0.0
      %446 = vmatpush1.msra.mxu0 0.0
      %447 = vmatprep.subr.mxu0 0.0
      %448 = vmatpush1.msra.mxu0 0.0
      %449 = vmatprep.subr.mxu0 0.0
      %450 = vmatpush1.msra.mxu0 0.0
      %451 = vmatprep.subr.mxu0 0.0
      %452 = vmatpush1.msra.mxu0 0.0
      %453 = vmatprep.subr.mxu0 0.0
      %454 = vmatpush1.msra.mxu0 0.0
      %455 = vmatprep.subr.mxu0 0.0
      %456 = vmatpush1.msra.mxu0 0.0
      %457 = vmatprep.subr.mxu0 0.0
      %458 = vmatpush1.msra.mxu0 0.0
      %459 = vmatprep.subr.mxu0 0.0
      %460 = vmatpush1.msra.mxu0 0.0
      %461 = vmatprep.subr.mxu0 0.0
      %462 = vmatpush1.msra.mxu0 0.0
      %463 = vmatprep.subr.mxu0 0.0
      %464 = vmatpush1.msra.mxu0 0.0
      %465 = vmatprep.subr.mxu0 0.0
      %466 = vmatpush1.msra.mxu0 0.0
      %467 = vmatprep.subr.mxu0 0.0
      %468 = vmatpush1.msra.mxu0 0.0
      %469 = vmatprep.subr.mxu0 0.0
      %470 = vmatpush1.msra.mxu0 0.0
      %471 = vmatprep.subr.mxu0 0.0
      %472 = vmatpush1.msra.mxu0 0.0
      %473 = vmatprep.subr.mxu0 0.0
      %474 = vmatpush1.msra.mxu0 0.0
      %475 = vmatprep.subr.mxu0 0.0
      %476 = vmatpush1.msra.mxu0 0.0
      %477 = vmatprep.subr.mxu0 0.0
      %478 = vmatpush1.msra.mxu0 0.0
      %479 = vmatprep.subr.mxu0 0.0
      %480 = vmatpush1.msra.mxu0 0.0
      %481 = vmatprep.subr.mxu0 0.0
      %482 = vmatpush1.msra.mxu0 0.0
      %483 = vmatprep.subr.mxu0 0.0
      %484 = vmatpush1.msra.mxu0 0.0
      %485 = vmatprep.subr.mxu0 0.0
      %486 = vmatpush1.msra.mxu0 0.0
      %487 = vmatprep.subr.mxu0 0.0
      %488 = vmatpush1.msra.mxu0 0.0
      %489 = vmatprep.subr.mxu0 0.0
      %490 = vmatpush1.msra.mxu0 0.0
      %491 = vmatprep.subr.mxu0 0.0
      %492 = vmatpush1.msra.mxu0 0.0
      %493 = vmatprep.subr.mxu0 0.0
      %494 = vmatpush1.msra.mxu0 0.0
      %495 = vmatprep.subr.mxu0 0.0
      %496 = vmatpush1.msra.mxu0 0.0
      %497 = vmatprep.subr.mxu0 0.0
      %498 = vmatpush1.msra.mxu0 0.0
      %499 = vmatprep.mubr.f32.mxu0 0.0
      %500 = vmatmul.mubr.f32.gmra.mrb[0].mxu0 %v433
      %v501 = vpop.f32.mrb[0].mxu0
      %v502 = vadd.f32 %v430, %v501
      %v503 = vpop.f32.mrb[0].mxu0
      %v504 = vadd.f32 %v430, %v503
      %505 = vdwg.mxu0
      %506 = vst [vmem:[%s177] sm:$0xff] %v502
      %507 = vst [vmem:[%s177 + $0x8] sm:$0xff] %v504
      %v508 = vadd.f32 %v502, %v504
      %509 = vadd.xlane.f32.xlu0 %v508
      %v510 = vpop.xlane.xlu0 %509
      %v511 = vmul.f32 %v502, %v502
      %v512 = vmul.f32 %v504, %v504
      %v513 = vadd.f32 %v511, %v512
      %514 = vadd.xlane.f32.xlu0 %v513
      %v515 = vpop.xlane.xlu0 %514
      %v516 = vsel %vm308, %v510, %v515
      %vm517 = vcmask 15360
      %518 = vst.msk [vmem:[%s181] sm:$0xff] %vm517, %v516
      %p519 = scmp.lt.s32.totalorder %s15, 1
      %s520 = scalar_select %p519, %s15, 1
      %s521 = smul.addr %s520, 2
      %s522 = smul.addr %s521, 8
      %s523 = scalar_lea.vmem %s2, %s522
      %p524 = scmp.lt.s32.totalorder %s15, 1
      %s525 = scalar_select %p524, %s15, 1
      %s526 = smul.addr %s525, 8
      %s527 = scalar_lea.vmem %s3, %s526
      // Predicated region
      $region29: #{detection_block_forward.2} parent=27 // pred_check
        %p528 = pneg %p80
      $region30: #{detection_block_forward.2} parent=27 // pred_check_branch
        %530 = sbr.rel (%p528) target = $region32
      $region31: #{detection_block_forward.2} parent=27 // pred_region
        _
      $region32: #{detection_block_forward.2} parent=27 // pred_fallthru
        _
      // Predicated region
      $region33: #{detection_block_forward.2} parent=27 // pred_check
        %p531 = pneg %p106
      $region34: #{detection_block_forward.2} parent=27 // pred_check_branch
        %533 = sbr.rel (%p531) target = $region36
      $region35: #{detection_block_forward.2} parent=27 // pred_region
        _
      $region36: #{detection_block_forward.2} parent=27 // pred_fallthru
        _
    $region28: #{detection_block_forward.2} parent=5 // pred_fallthru
      _
    %p534 = scmp.le.s32.totalorder 2, %s10
    // Predicated region
    $region37: #{detection_block_forward.2} parent=5 // pred_check
      %p535 = pneg %p534
    $region38: #{detection_block_forward.2} parent=5 // pred_check_branch
      %537 = sbr.rel (%p535) target = $region40
    $region39: #{detection_block_forward.2} parent=5 // pred_region
      %s538 = ssub.s32 %s10, 2
      // Predicated region
      $region41: #{detection_block_forward.2} parent=39 // pred_check
        %p539 = pneg %p86
      $region42: #{detection_block_forward.2} parent=39 // pred_check_branch
        %541 = sbr.rel (%p539) target = $region44
      $region43: #{detection_block_forward.2} parent=39 // pred_region
        %p542 = scmp.lt.s32.totalorder %s16, 1
        %s543 = scalar_select %p542, %s16, 1
        %s544 = smul.addr %s543, 2
        %s545 = smul.addr %s544, 8
        %s546 = scalar_lea.vmem %s2, %s545
      $region44: #{detection_block_forward.2} parent=39 // pred_fallthru
        _
      // Predicated region
      $region45: #{detection_block_forward.2} parent=39 // pred_check
        %p547 = pneg %p112
      $region46: #{detection_block_forward.2} parent=39 // pred_check_branch
        %549 = sbr.rel (%p547) target = $region48
      $region47: #{detection_block_forward.2} parent=39 // pred_region
        %p550 = scmp.lt.s32.totalorder %s16, 1
        %s551 = scalar_select %p550, %s16, 1
        %s552 = smul.addr %s551, 8
        %s553 = scalar_lea.vmem %s3, %s552
      $region48: #{detection_block_forward.2} parent=39 // pred_fallthru
        _
    $region40: #{detection_block_forward.2} parent=5 // pred_fallthru
      _
  $region6: #{detection_block_forward.2} parent=0 // loop_footer
    %s14 = sadd.s32 1, %s10
  $region7: #{detection_block_forward.2} parent=0 // loop_footer_branch
    %9 = sbr.rel target = $region3
  $region8: #{detection_block_forward.2} parent=0 // loop_exit
    _

</llo_original>
